<compile_context>
chip_gen: v5e
topology: v5e:2x2
jax: 0.10.0
libtpu: 0.0.40
codegen_flags: <defaults>
</compile_context>

<pallas_src>
import jax
import jax.numpy as jnp
from jax.experimental import pallas as pl
from jax.experimental.pallas import tpu as pltpu


def _dense_bias_kernel(x_ref, wt_ref, b_ref, o_ref):
    # x_ref: (tm, H) compute dtype, wt_ref: (H, tn) compute dtype,
    # b_ref: (1, tn) f32, o_ref: (tm, tn) output dtype.
    acc = jnp.dot(x_ref[...], wt_ref[...], preferred_element_type=jnp.float32)
    acc = acc + b_ref[...]  # bias fused in-kernel: rides free VPU slots under the MXU
    # TODO(synk): nn.Dropout is identity in eval mode; training-mode masking
    # (pltpu.prng_seed + pltpu.prng_random_bits + pltpu.stateful_bernoulli) not implemented.
    o_ref[...] = acc.astype(o_ref.dtype)


def _round_up(a: int, b: int) -> int:
    return ((a + b - 1) // b) * b


def vit_self_output(hidden_states, input_tensor, weight, bias, *,
                    tm=512, tn=None, compute_dtype=None, weight_is_transposed=False):
    """Equivalent of ModifiedViTSelfOutput.forward (dropout in eval mode).

    hidden_states: [B, S, H]
    input_tensor:  [B, S, H]   (unused — residual is added in ViTLayer)
    weight:        [H, H]      nn.Linear.weight ([out, in]) unless
                               weight_is_transposed=True (then [in, out]).
    bias:          [H]
    tm:            row tile (multiple of 8; 512 default amortizes the
                   ~0.35 us/step grid overhead and feeds the 256-wide MXU).
    tn:            output-column tile; default keeps the whole W^T resident
                   in VMEM unless it would blow the VMEM budget, in which
                   case a 128-multiple column tile is chosen automatically.
    compute_dtype: matmul operand dtype (e.g. jnp.bfloat16 for the native MXU
                   path); accumulation is always f32, output keeps input dtype.
    """
    del input_tensor  # not used by this module's forward
    B, S, H = hidden_states.shape
    out_dtype = hidden_states.dtype
    compute_dtype = jnp.dtype(hidden_states.dtype if compute_dtype is None
                              else compute_dtype)

    M = B * S
    x2d = hidden_states.reshape(M, H).astype(compute_dtype)
    wt = (weight if weight_is_transposed else weight.T).astype(compute_dtype)
    b2d = bias.reshape(1, H).astype(jnp.float32)

    cbytes = compute_dtype.itemsize
    obytes = jnp.dtype(out_dtype).itemsize

    # --- Row tiling: big tiles, padded tail only (no divisibility assert). ---
    tm_eff = _round_up(min(tm, _round_up(M, 8)), 8)
    m_pad = _round_up(M, tm_eff)
    steps_m = m_pad // tm_eff
    if m_pad != M:
        x2d = jnp.pad(x2d, ((0, m_pad - M), (0, 0)))

    # --- Column tiling: keep W^T fully resident (single DMA, reused across all
    #     row tiles) unless it would blow the VMEM budget; then tile output
    #     columns with a 128-multiple that divides H. ---
    weight_budget = 24 * 1024 * 1024  # leaves headroom on v7x's 64 MiB VMEM
    if tn is None:
        tn_eff = H
        if H % 128 == 0 and H * H * cbytes > weight_budget:
            for cand in (2048, 1024, 512, 256, 128):
                if H % cand == 0 and 2 * H * cand * cbytes <= weight_budget:
                    tn_eff = cand
                    break
            else:
                tn_eff = 128
    else:
        tn_eff = tn
    if H % tn_eff != 0:
        tn_eff = H
    steps_n = H // tn_eff

    # --- VMEM budget: double-buffered x/out tiles + weight/bias tiles.
    #     (x's index_map is invariant along the inner n axis, and with
    #     steps_n == 1 the weight index_map is fully invariant -> DMA'd once;
    #     we still budget the second buffer the default pipeline allocates.) ---
    vmem_bytes = (2 * tm_eff * H * cbytes          # x      (double-buffered)
                  + 2 * tm_eff * tn_eff * obytes   # out    (double-buffered)
                  + 2 * H * tn_eff * cbytes        # weight
                  + 2 * 8 * tn_eff * 4)            # bias (sublane-padded)
    vmem_limit = int(min(max(vmem_bytes * 3 // 2, 32 * 1024 * 1024),
                         60 * 1024 * 1024))

    cost = pl.CostEstimate(
        flops=2 * m_pad * H * H,
        transcendentals=0,
        bytes_accessed=(m_pad * H * cbytes + H * H * cbytes + H * 4
                        + m_pad * H * obytes))

    out2d = pl.pallas_call(
        _dense_bias_kernel,
        out_shape=jax.ShapeDtypeStruct((m_pad, H), out_dtype),
        grid_spec=pltpu.PrefetchScalarGridSpec(
            num_scalar_prefetch=0,
            grid=(steps_m, steps_n),
            in_specs=[
                pl.BlockSpec((tm_eff, H), lambda i, j: (i, 0)),       # x row tile
                pl.BlockSpec((H, tn_eff), lambda i, j: (0, j)),       # W^T column tile
                pl.BlockSpec((1, tn_eff), lambda i, j: (0, j)),       # bias
            ],
            out_specs=pl.BlockSpec((tm_eff, tn_eff), lambda i, j: (i, j)),
        ),
        compiler_params=pltpu.CompilerParams(
            dimension_semantics=("parallel", "parallel"),
            vmem_limit_bytes=vmem_limit),
        cost_estimate=cost,
    )(x2d, wt, b2d)

    return out2d[:M].reshape(B, S, H)


if __name__ == "__main__":
    # Small synthetic shapes consistent with the module's forward:
    # batch=2, seq=8, hidden=32.
    B, S, H = 2, 8, 32
    key = jax.random.PRNGKey(0)
    k1, k2, k3, k4 = jax.random.split(key, 4)

    hidden_states = jax.random.normal(k1, (B, S, H), dtype=jnp.float32)
    input_tensor = jax.random.normal(k2, (B, S, H), dtype=jnp.float32)

    # Deterministic parameter init (nn.Linear(H, H)): weight [out, in], bias [H].
    weight = jax.random.normal(k3, (H, H), dtype=jnp.float32) * (1.0 / jnp.sqrt(H))
    bias = jax.random.normal(k4, (H,), dtype=jnp.float32) * 0.01

    # Plain-JAX reference.
    ref = (hidden_states.reshape(-1, H) @ weight.T + bias).reshape(B, S, H)

    # Pre-transpose once ("parameter-load time") so the hot path never
    # re-transposes the [H, H] weight in HBM per forward.
    weight_t = jnp.asarray(weight.T)

    # f32 path (tight check).
    out = vit_self_output(hidden_states, input_tensor, weight_t, bias,
                          weight_is_transposed=True)
    out = jax.block_until_ready(out)
    assert jnp.allclose(out, ref, atol=1e-5, rtol=1e-5), "f32 mismatch vs reference"

    # Default path (PyTorch-layout weight, transposed inside the wrapper).
    out2 = jax.block_until_ready(
        vit_self_output(hidden_states, input_tensor, weight, bias))
    assert jnp.allclose(out2, ref, atol=1e-5, rtol=1e-5), "default-path mismatch"

    # bf16-operand path (MXU-native); accumulation stays f32, output stays f32.
    out_bf16 = jax.block_until_ready(
        vit_self_output(hidden_states, input_tensor, weight_t, bias,
                        weight_is_transposed=True, compute_dtype=jnp.bfloat16))
    assert jnp.allclose(out_bf16, ref, atol=1e-1, rtol=1e-1), "bf16 mismatch vs reference"

    # Column-tiled path exercises the 2-D grid (tn < H is only meaningful for
    # 128-multiples; here it just collapses back to a single column tile).
    out3 = jax.block_until_ready(
        vit_self_output(hidden_states, input_tensor, weight_t, bias,
                        weight_is_transposed=True, tm=8, tn=32))
    assert jnp.allclose(out3, ref, atol=1e-5, rtol=1e-5), "tiled-path mismatch"

    print("KERNEL_OK")
</pallas_src>

<mosaic_0001>
module attributes {stable_mosaic.version = 11 : i64} {
  func.func @_dense_bias_kernel(%arg0: i32, %arg1: i32, %arg2: memref<16x32xf32, #tpu.memory_space<vmem>>, %arg3: memref<32x32xf32, #tpu.memory_space<vmem>>, %arg4: memref<1x32xf32, #tpu.memory_space<vmem>>, %arg5: memref<16x32xf32, #tpu.memory_space<vmem>>) attributes {dimension_semantics = [#tpu.dimension_semantics<parallel>, #tpu.dimension_semantics<parallel>], iteration_bounds = array<i64: 1, 1>, scalar_prefetch = 0 : i64, scratch_operands = 0 : i64, tpu.core_type = #tpu.core_type<tc>, window_params = [{transform_indices = @transform_0, window_bounds = array<i64: 16, 32>}, {transform_indices = @transform_1, window_bounds = array<i64: 32, 32>}, {transform_indices = @transform_2, window_bounds = array<i64: 1, 32>}, {transform_indices = @transform_3, window_bounds = array<i64: 16, 32>}]} {
    %c0 = arith.constant 0 : index
    %c0_0 = arith.constant 0 : index
    %0 = vector.load %arg2[%c0, %c0_0] : memref<16x32xf32, #tpu.memory_space<vmem>>, vector<16x32xf32>
    %c0_1 = arith.constant 0 : index
    %c0_2 = arith.constant 0 : index
    %1 = vector.load %arg3[%c0_1, %c0_2] : memref<32x32xf32, #tpu.memory_space<vmem>>, vector<32x32xf32>
    %cst = arith.constant dense<0.000000e+00> : vector<16x32xf32>
    %2 = tpu.matmul %0, %1, %cst {dimension_numbers = #tpu.dot_dimension_numbers<[1], [0], [0], [1], [0, 0, 1, 1], [], []>} : vector<16x32xf32>, vector<32x32xf32>, vector<16x32xf32> -> vector<16x32xf32>
    %c0_3 = arith.constant 0 : index
    %c0_4 = arith.constant 0 : index
    %3 = vector.load %arg4[%c0_3, %c0_4] : memref<1x32xf32, #tpu.memory_space<vmem>>, vector<1x32xf32>
    %4 = vector.broadcast %3 : vector<1x32xf32> to vector<16x32xf32>
    %5 = arith.addf %2, %4 : vector<16x32xf32>
    %c0_5 = arith.constant 0 : index
    %c0_6 = arith.constant 0 : index
    %6 = vector.load %arg5[%c0_5, %c0_6] : memref<16x32xf32, #tpu.memory_space<vmem>>, vector<16x32xf32>
    tpu.vector_store %arg5[%c0_5, %c0_6], %5 {strides = array<i32>} : memref<16x32xf32, #tpu.memory_space<vmem>>, vector<16x32xf32>,
    return
  }
  func.func @transform_0(%arg0: i32, %arg1: i32) -> (i32, i32) {
    %c0_i32 = arith.constant 0 : i32
    %c0_i32_0 = arith.constant 0 : i32
    return %arg0, %c0_i32 : i32, i32
  }
  func.func @transform_1(%arg0: i32, %arg1: i32) -> (i32, i32) {
    %c0_i32 = arith.constant 0 : i32
    %c0_i32_0 = arith.constant 0 : i32
    return %c0_i32, %arg1 : i32, i32
  }
  func.func @transform_2(%arg0: i32, %arg1: i32) -> (i32, i32) {
    %c0_i32 = arith.constant 0 : i32
    %c0_i32_0 = arith.constant 0 : i32
    return %c0_i32, %arg1 : i32, i32
  }
  func.func @transform_3(%arg0: i32, %arg1: i32) -> (i32, i32) {
    %c0_i32 = arith.constant 0 : i32
    return %arg0, %arg1 : i32, i32
  }
}

</mosaic_0001>

<llo_original>
// kernel: tpu_custom_call.1
$region0: #{tpu_custom_call.1}
  #allocation0 [shape = 'u32[]', space=smem, size = 0x4, offset = 0x4, fixed_abs, tag = 'smem constant byte address 0x4 - core index']
  #allocation1 [shape = 'u32[72,128]{1,0:T(1,128)}', space=vmem, size = 0x9000, scoped, tag = 'internal scratch']
  %s0 = inlined_call_operand.hbm [shape: f32[16,32], index: 0, kind: input, shape index: {}]
  %s1 = inlined_call_operand.hbm [shape: f32[32,32], index: 1, kind: input, shape index: {}]
  %s2 = inlined_call_operand.vmem [shape: f32[1,32], index: 2, kind: input, shape index: {}]
  %s3 = inlined_call_operand.hbm [shape: f32[16,32], index: 3, kind: output, shape index: {}]
  %s4 = sld [smem:[#allocation0]]
  $region30: #{tpu_custom_call.1} parent=0
    _
  %s6 = ssub.s32 1, %s4
  %s7 = scalar_select 0, %s6, %s4
  $region1: #{tpu_custom_call.1} parent=0
    #allocation2 [shape = 'u8[8192]{0}', space=vmem, size = 0x2000, scoped, tag = 'input window, operand 0, single buffered']
    #allocation3 [shape = 's32[1]{0}', space=sflag, size = 0x4, scoped, tag = 'scoped memory for tpu_custom_call.1']
    #allocation4 [shape = 's32[1]{0}', space=sflag, size = 0x4, scoped, tag = 'scoped memory for tpu_custom_call.1']
    #allocation5 [shape = 'u8[16384]{0}', space=vmem, size = 0x4000, scoped, tag = 'input window, operand 1, single buffered']
    #allocation6 [shape = 's32[1]{0}', space=sflag, size = 0x4, scoped, tag = 'scoped memory for tpu_custom_call.1']
    #allocation7 [shape = 'u8[8192]{0}', space=vmem, size = 0x2000, scoped, tag = 'output window, operand 0, single buffered']
    %8 = vsyncpa [#allocation3], 0
    %9 = vsyncpa [#allocation6], 0
    %10 = vsyncpa [#allocation4], 0
    // Predicated region
    $region2: #{tpu_custom_call.1} parent=1 // pred_check
      _
    $region3: #{tpu_custom_call.1} parent=1 // pred_check_branch
      %12 = sbr.rel (0) target = $region5
    $region4: #{tpu_custom_call.1} parent=1 // pred_region
      %14 = vsyncadd [#allocation3], 0
      %s15 = sshll.u32 %s0, 4
      %s16 = int_to_ptr.hbm [resolvable:$true] %s15
      %s17 = sshll.u32 [#allocation2], 4
      %s18 = int_to_ptr.vmem [resolvable:$true] %s17
      %23 = dma.hbm_to_vmem [thread:$0]  %s16, 256, %s18, [#allocation3], 128, 128, 8
    $region5: #{tpu_custom_call.1} parent=1 // pred_fallthru
      _
    // Predicated region
    $region6: #{tpu_custom_call.1} parent=1 // pred_check
      _
    $region7: #{tpu_custom_call.1} parent=1 // pred_check_branch
      %25 = sbr.rel (0) target = $region9
    $region8: #{tpu_custom_call.1} parent=1 // pred_region
      %27 = vsyncadd [#allocation6], 0
      %s28 = sshll.u32 %s1, 4
      %s29 = int_to_ptr.hbm [resolvable:$true] %s28
      %s30 = sshll.u32 [#allocation5], 4
      %s31 = int_to_ptr.vmem [resolvable:$true] %s30
      %36 = dma.hbm_to_vmem [thread:$0]  %s29, 512, %s31, [#allocation6], 128, 128, 8
    $region9: #{tpu_custom_call.1} parent=1 // pred_fallthru
      _
    // Predicated region
    $region10: #{tpu_custom_call.1} parent=1 // pred_check
      _
    $region11: #{tpu_custom_call.1} parent=1 // pred_check_branch
      %38 = sbr.rel (0) target = $region13
    $region12: #{tpu_custom_call.1} parent=1 // pred_region
      _
    $region13: #{tpu_custom_call.1} parent=1 // pred_fallthru
      _
    // Predicated region
    $region14: #{tpu_custom_call.1} parent=1 // pred_check
      _
    $region15: #{tpu_custom_call.1} parent=1 // pred_check_branch
      %40 = sbr.rel (0) target = $region17
    $region16: #{tpu_custom_call.1} parent=1 // pred_region
      %42 = dma.done [#allocation3], 256
    $region17: #{tpu_custom_call.1} parent=1 // pred_fallthru
      _
    // Predicated region
    $region18: #{tpu_custom_call.1} parent=1 // pred_check
      _
    $region19: #{tpu_custom_call.1} parent=1 // pred_check_branch
      %44 = sbr.rel (0) target = $region21
    $region20: #{tpu_custom_call.1} parent=1 // pred_region
      %46 = dma.done [#allocation6], 512
    $region21: #{tpu_custom_call.1} parent=1 // pred_fallthru
      _
    %v47 = vld [vmem:[#allocation2] sm:$0xff]
    %v48 = vld [vmem:[#allocation2 + $0x8] sm:$0xff]
    %v49 = vld [vmem:[#allocation5] sm:$0xff]
    %v50 = vld [vmem:[#allocation5 + $0x8] sm:$0xff]
    %v51 = vld [vmem:[#allocation5 + $0x10] sm:$0xff]
    %v52 = vld [vmem:[#allocation5 + $0x18] sm:$0xff]
    %v53 = vld [vmem:[%s2] sm:$0x1]
    %v55 = vperm.slane %v53, 0
    %vm57 = vcmask 261120
    %v59 = vsel %vm57, %v47, 0
    %v62 = vsel %vm57, %v48, 0
    %64 = vmatpush.msra.mxu0 0.0
    %65 = vmatpush.msra.mxu0 0.0
    %66 = vmatpush.msra.mxu0 0.0
    %67 = vmatpush.msra.mxu0 0.0
    %68 = vmatpush.msra.mxu0 0.0
    %69 = vmatpush.msra.mxu0 0.0
    %70 = vmatpush.msra.mxu0 0.0
    %71 = vmatpush.msra.mxu0 0.0
    %72 = vmatpush.msra.mxu0 0.0
    %73 = vmatpush.msra.mxu0 0.0
    %74 = vmatpush.msra.mxu0 0.0
    %75 = vmatpush.msra.mxu0 0.0
    %76 = vmatpush.msra.mxu0 %v52
    %77 = vmatpush.msra.mxu0 %v51
    %78 = vmatpush.msra.mxu0 %v50
    %79 = vmatpush.msra.mxu0 %v49
    %80 = vmatmul.f32.gmra.mxu0 %v59
    %v81 = vpop.f32.mrf.mxu0
    %v82 = vadd.f32 %v55, %v81
    %83 = vmatmul.f32.gmra.mxu0 %v62
    %v84 = vpop.f32.mrf.mxu0
    %v85 = vadd.f32 %v55, %v84
    %86 = vdwg.mxu0
    %87 = vst.msk [vmem:[#allocation7] sm:$0xff] %vm57, %v82
    %88 = vst.msk [vmem:[#allocation7 + $0x8] sm:$0xff] %vm57, %v85
    // Predicated region
    $region22: #{tpu_custom_call.1} parent=1 // pred_check
      _
    $region23: #{tpu_custom_call.1} parent=1 // pred_check_branch
      %90 = sbr.rel (0) target = $region25
    $region24: #{tpu_custom_call.1} parent=1 // pred_region
      %92 = vsyncadd [#allocation4], 0
      %s93 = sshll.u32 [#allocation7], 4
      %s94 = int_to_ptr.vmem [resolvable:$true] %s93
      %s95 = sshll.u32 %s3, 4
      %s96 = int_to_ptr.hbm [resolvable:$true] %s95
      %101 = dma.vmem_to_hbm [thread:$0]  %s94, 256, %s96, [#allocation4], 128, 128, 8
    $region25: #{tpu_custom_call.1} parent=1 // pred_fallthru
      _
    // Predicated region
    $region26: #{tpu_custom_call.1} parent=1 // pred_check
      _
    $region27: #{tpu_custom_call.1} parent=1 // pred_check_branch
      %103 = sbr.rel (0) target = $region29
    $region28: #{tpu_custom_call.1} parent=1 // pred_region
      %105 = dma.done [#allocation4], 256
    $region29: #{tpu_custom_call.1} parent=1 // pred_fallthru
      _
    %106 = vsyncpa [#allocation3], 1
    %107 = vsyncpa [#allocation6], 1
    %108 = vsyncpa [#allocation4], 1

</llo_original>
